<compile_context>
chip_gen: v6e
topology: v6e:2x2x1
jax: 0.10.0
libtpu: 0.0.40
codegen_flags: <defaults>
</compile_context>

<pallas_src>
import functools

import jax
import jax.numpy as jnp
from jax.experimental import pallas as pl
from jax.experimental.pallas import tpu as pltpu


def _ngram_kernel(x_ref, w1_ref, b1_ref, w2_ref, b2_ref,
                  logits_ref, lse_ref,
                  h_ref, m_ref, l_ref,
                  *, vocab_size, tile_v):
    """One (batch tile, vocab tile) grid step.

    x:   (TB, C*D)  bf16   gathered context embeddings
    w1:  (C*D, H)   bf16
    b1:  (1, H)     f32
    w2:  (H, TV)    bf16   vocab tile of linear2 weight
    b2:  (1, TV)    f32
    logits out: (TB, TV) f32  raw (un-normalized) logits for this vocab tile
    lse out:    (TB, 1)  f32  log-sum-exp over the real vocab (written at last V step)
    scratch: h (TB, H) bf16, m (TB, 1) f32, l (TB, 1) f32
    """
    v = pl.program_id(1)
    n_v = pl.num_programs(1)

    @pl.when(v == 0)
    def _():
        # linear1 + ReLU once per batch tile; resident in scratch across V steps.
        h = jnp.dot(x_ref[...], w1_ref[...], preferred_element_type=jnp.float32)
        h = jnp.maximum(h + b1_ref[...], 0.0)
        h_ref[...] = h.astype(h_ref.dtype)
        m_ref[...] = jnp.full_like(m_ref, -jnp.inf)
        l_ref[...] = jnp.zeros_like(l_ref)

    # linear2 on this vocab tile (MXU, f32 accumulation).
    logits = jnp.dot(h_ref[...], w2_ref[...],
                     preferred_element_type=jnp.float32) + b2_ref[...]

    # Mask padded vocab lanes (only the trailing tile has any).
    col = v * tile_v + jax.lax.broadcasted_iota(jnp.int32, logits.shape, 1)
    logits = jnp.where(col < vocab_size, logits, -jnp.inf)
    logits_ref[...] = logits

    # Online log-sum-exp accumulation (flash-softmax style).
    m_prev = m_ref[...]
    m_new = jnp.maximum(m_prev, jnp.max(logits, axis=-1, keepdims=True))
    l_ref[...] = (jnp.exp(m_prev - m_new) * l_ref[...]
                  + jnp.sum(jnp.exp(logits - m_new), axis=-1, keepdims=True))
    m_ref[...] = m_new

    @pl.when(v == n_v - 1)
    def _():
        lse_ref[...] = m_ref[...] + jnp.log(l_ref[...])


def prepare_ngram_params(emb_table, w1, b1, w2, b2, *,
                         weight_dtype=jnp.bfloat16, block_v=2048):
    """One-time setup: cast weights to bf16 and pad the vocab axis of w2/b2.

    Call once and reuse the result across forward calls (avoids re-casting /
    re-padding ~MBs of w2 on every step at realistic vocab sizes).
    """
    vocab_size, _ = emb_table.shape
    _, hidden = w1.shape
    vpad_base = pl.cdiv(vocab_size, 128) * 128
    tile_v = vpad_base if vpad_base <= block_v else block_v
    vpad = pl.cdiv(vocab_size, tile_v) * tile_v

    emb_p = emb_table.astype(weight_dtype)                      # gather done in XLA
    w1_p = w1.astype(weight_dtype)                              # (C*D, H)
    b1_p = b1.reshape(1, hidden).astype(jnp.float32)
    w2_p = jnp.zeros((hidden, vpad), weight_dtype).at[:, :vocab_size].set(
        w2.astype(weight_dtype))
    b2_p = jnp.zeros((1, vpad), jnp.float32).at[:, :vocab_size].set(
        b2.reshape(1, vocab_size).astype(jnp.float32))
    return emb_p, w1_p, b1_p, w2_p, b2_p


@functools.partial(jax.jit,
                   static_argnames=("vocab_size", "block_b", "block_v"))
def ngram_forward_pallas(ids, emb_p, w1_p, b1_p, w2_p, b2_p, *,
                         vocab_size, block_b=128, block_v=2048):
    """Batched NGramLanguageModeler forward.

    ids: (B, context_size) int32.  Returns (B, vocab_size) float32 log-probs;
    row i equals the PyTorch module's forward() on context ids[i].
    Weights must come from prepare_ngram_params().
    """
    ids = ids.astype(jnp.int32)
    batch, _ = ids.shape
    d_in, hidden = w1_p.shape
    vpad = w2_p.shape[1]
    tile_v = vpad if vpad <= block_v else block_v
    n_v = vpad // tile_v

    tile_b = block_b if batch >= block_b else max(8, pl.cdiv(batch, 8) * 8)
    n_b = pl.cdiv(batch, tile_b)
    b_pad = n_b * tile_b

    # Embedding gather in XLA (tiny: B*C rows of D); kernel gets bf16 x (B, C*D).
    x = jnp.take(emb_p, ids, axis=0).reshape(batch, d_in)
    if b_pad != batch:
        x = jnp.zeros((b_pad, d_in), x.dtype).at[:batch].set(x)

    kernel = functools.partial(_ngram_kernel, vocab_size=vocab_size,
                               tile_v=tile_v)
    logits, lse = pl.pallas_call(
        kernel,
        out_shape=(jax.ShapeDtypeStruct((b_pad, vpad), jnp.float32),
                   jax.ShapeDtypeStruct((b_pad, 1), jnp.float32)),
        grid=(n_b, n_v),
        in_specs=[
            pl.BlockSpec((tile_b, d_in), lambda i, v: (i, 0)),    # x
            pl.BlockSpec((d_in, hidden), lambda i, v: (0, 0)),    # w1 (grid-invariant, tiny)
            pl.BlockSpec((1, hidden), lambda i, v: (0, 0)),       # b1
            pl.BlockSpec((hidden, tile_v), lambda i, v: (0, v)),  # w2 vocab tile
            pl.BlockSpec((1, tile_v), lambda i, v: (0, v)),       # b2 vocab tile
        ],
        out_specs=(
            pl.BlockSpec((tile_b, tile_v), lambda i, v: (i, v)),  # raw logits
            pl.BlockSpec((tile_b, 1), lambda i, v: (i, 0)),       # lse (resident over V)
        ),
        scratch_shapes=[
            pltpu.VMEM((tile_b, hidden), w2_p.dtype),  # h (computed at V step 0)
            pltpu.VMEM((tile_b, 1), jnp.float32),      # running max
            pltpu.VMEM((tile_b, 1), jnp.float32),      # running sum-exp
        ],
        compiler_params=pltpu.CompilerParams(
            dimension_semantics=("parallel", "arbitrary")),
    )(x, w1_p, b1_p, w2_p, b2_p)

    # Cheap fused normalization + un-padding in XLA.
    return logits[:batch, :vocab_size] - lse[:batch]


def ngram_forward_reference(ids, emb_table, w1, b1, w2, b2,
                            weight_dtype=jnp.bfloat16):
    """Pure-JAX reference with the same bf16 weight rounding as the kernel."""
    hp = jax.lax.Precision.HIGHEST
    f32 = jnp.float32
    emb = emb_table.astype(weight_dtype).astype(f32)
    w1f = w1.astype(weight_dtype).astype(f32)
    w2f = w2.astype(weight_dtype).astype(f32)
    batch = ids.shape[0]
    x = jnp.take(emb, ids, axis=0).reshape(batch, -1)   # == embeddings(ids).view
    h = jnp.maximum(jnp.dot(x, w1f, precision=hp) + b1.reshape(1, -1), 0.0)
    h = h.astype(weight_dtype).astype(f32)               # kernel feeds bf16 h to MXU
    logits = jnp.dot(h, w2f, precision=hp) + b2.reshape(1, -1)
    return jax.nn.log_softmax(logits, axis=-1)


def _init_params(key, vocab_size, emb_dim, context_size, hidden):
    d_in = context_size * emb_dim
    k_emb, k_w1, k_b1, k_w2, k_b2 = jax.random.split(key, 5)
    emb_table = jax.random.normal(k_emb, (vocab_size, emb_dim), dtype=jnp.float32)
    bound1 = 1.0 / d_in ** 0.5
    w1 = jax.random.uniform(k_w1, (d_in, hidden), minval=-bound1, maxval=bound1,
                            dtype=jnp.float32)
    b1 = jax.random.uniform(k_b1, (hidden,), minval=-bound1, maxval=bound1,
                            dtype=jnp.float32)
    bound2 = 1.0 / hidden ** 0.5
    w2 = jax.random.uniform(k_w2, (hidden, vocab_size), minval=-bound2,
                            maxval=bound2, dtype=jnp.float32)
    b2 = jax.random.uniform(k_b2, (vocab_size,), minval=-bound2, maxval=bound2,
                            dtype=jnp.float32)
    return emb_table, w1, b1, w2, b2


if __name__ == "__main__":
    raw_text = (
        "We are about to study the idea of a computational process.\n"
        "Computational processes are abstract beings that inhabit computers.\n"
        "As they evolve, processes manipulate other abstract things called data.\n"
        "The evolution of a process is directed by a pattern of rules\n"
        "called a program. People create programs to direct processes. In effect,\n"
        "we conjure the spirits of the computer with our spells."
    ).split()
    vocab = sorted(set(raw_text))
    vocab_size = len(vocab)

    embedding_dim = 10
    context_size = 2
    hidden = 128
    batch = 128

    key = jax.random.PRNGKey(0)
    k_params, k_ids, k_params2, k_ids2 = jax.random.split(key, 4)

    emb_table, w1, b1, w2, b2 = _init_params(
        k_params, vocab_size, embedding_dim, context_size, hidden)
    ids = jax.random.randint(k_ids, (batch, context_size), 0, vocab_size,
                             dtype=jnp.int32)

    # One-time weight preparation (bf16 cast + vocab padding), reused per call.
    params = prepare_ngram_params(emb_table, w1, b1, w2, b2)

    log_probs = ngram_forward_pallas(ids, *params, vocab_size=vocab_size)
    log_probs = jax.block_until_ready(log_probs)
    assert log_probs.shape == (batch, vocab_size)

    ref = ngram_forward_reference(ids, emb_table, w1, b1, w2, b2)
    max_err = float(jnp.max(jnp.abs(log_probs - ref)))
    assert max_err < 2e-3, max_err
    # Each row must be a valid log-probability distribution over the real vocab.
    assert jnp.allclose(jnp.exp(log_probs).sum(axis=-1), 1.0, atol=1e-3)

    # Single-context path (the literal PyTorch usage: one context per call).
    one = ngram_forward_pallas(ids[:1], *params, vocab_size=vocab_size)
    one = jax.block_until_ready(one)
    assert one.shape == (1, vocab_size)
    assert float(jnp.max(jnp.abs(one - ref[:1]))) < 2e-3

    # Second config: synthetic larger vocab exercising the V-tiled online-LSE
    # path (3 vocab tiles) and multi-tile padded batch.
    vocab2, emb_dim2, ctx2, hidden2, batch2 = 300, 16, 3, 128, 96
    emb_t2, w1_2, b1_2, w2_2, b2_2 = _init_params(
        k_params2, vocab2, emb_dim2, ctx2, hidden2)
    ids2 = jax.random.randint(k_ids2, (batch2, ctx2), 0, vocab2, dtype=jnp.int32)
    params2 = prepare_ngram_params(emb_t2, w1_2, b1_2, w2_2, b2_2, block_v=128)
    lp2 = ngram_forward_pallas(ids2, *params2, vocab_size=vocab2,
                               block_b=64, block_v=128)
    lp2 = jax.block_until_ready(lp2)
    ref2 = ngram_forward_reference(ids2, emb_t2, w1_2, b1_2, w2_2, b2_2)
    assert lp2.shape == (batch2, vocab2)
    assert float(jnp.max(jnp.abs(lp2 - ref2))) < 5e-3
    assert jnp.allclose(jnp.exp(lp2).sum(axis=-1), 1.0, atol=1e-3)

    print("KERNEL_OK")
</pallas_src>

<mosaic_0001>
module attributes {stable_mosaic.version = 11 : i64} {
  func.func @_ngram_kernel(%arg0: i32, %arg1: i32, %arg2: memref<128x20xbf16, #tpu.memory_space<vmem>>, %arg3: memref<20x128xbf16, #tpu.memory_space<vmem>>, %arg4: memref<1x128xf32, #tpu.memory_space<vmem>>, %arg5: memref<128x128xbf16, #tpu.memory_space<vmem>>, %arg6: memref<1x128xf32, #tpu.memory_space<vmem>>, %arg7: memref<128x128xf32, #tpu.memory_space<vmem>>, %arg8: memref<128x1xf32, #tpu.memory_space<vmem>>, %arg9: memref<128x128xbf16, #tpu.memory_space<vmem>>, %arg10: memref<128x1xf32, #tpu.memory_space<vmem>>, %arg11: memref<128x1xf32, #tpu.memory_space<vmem>>) attributes {dimension_semantics = [#tpu.dimension_semantics<parallel>, #tpu.dimension_semantics<arbitrary>], iteration_bounds = array<i64: 1, 1>, scalar_prefetch = 0 : i64, scratch_operands = 3 : i64, tpu.core_type = #tpu.core_type<tc>, window_params = [{transform_indices = @transform_0, window_bounds = array<i64: 128, 20>}, {pipeline_mode = #tpu.pipeline_mode<synchronous>, transform_indices = @transform_1, window_bounds = array<i64: 20, 128>}, {pipeline_mode = #tpu.pipeline_mode<synchronous>, transform_indices = @transform_2, window_bounds = array<i64: 1, 128>}, {transform_indices = @transform_3, window_bounds = array<i64: 128, 128>}, {transform_indices = @transform_4, window_bounds = array<i64: 1, 128>}, {transform_indices = @transform_5, window_bounds = array<i64: 128, 128>}, {transform_indices = @transform_6, window_bounds = array<i64: 128, 1>}]} {
    %c0_i32 = arith.constant 0 : i32
    %0 = arith.cmpi eq, %arg1, %c0_i32 : i32
    %1 = arith.extui %0 : i1 to i32
    %c0_i32_0 = arith.constant 0 : i32
    %2 = arith.cmpi ne, %1, %c0_i32_0 : i32
    scf.if %2 {
      %c0_21 = arith.constant 0 : index
      %c0_22 = arith.constant 0 : index
      %37 = vector.load %arg2[%c0_21, %c0_22] : memref<128x20xbf16, #tpu.memory_space<vmem>>, vector<128x20xbf16>
      %c0_23 = arith.constant 0 : index
      %c0_24 = arith.constant 0 : index
      %38 = vector.load %arg3[%c0_23, %c0_24] : memref<20x128xbf16, #tpu.memory_space<vmem>>, vector<20x128xbf16>
      %cst_25 = arith.constant dense<0.000000e+00> : vector<128x128xf32>
      %39 = tpu.matmul %37, %38, %cst_25 {dimension_numbers = #tpu.dot_dimension_numbers<[1], [0], [0], [1], [0, 0, 1, 1], [], []>} : vector<128x20xbf16>, vector<20x128xbf16>, vector<128x128xf32> -> vector<128x128xf32>
      %c0_26 = arith.constant 0 : index
      %c0_27 = arith.constant 0 : index
      %40 = vector.load %arg4[%c0_26, %c0_27] : memref<1x128xf32, #tpu.memory_space<vmem>>, vector<1x128xf32>
      %41 = vector.broadcast %40 : vector<1x128xf32> to vector<128x128xf32>
      %42 = arith.addf %39, %41 : vector<128x128xf32>
      %cst_28 = arith.constant 0.000000e+00 : f32
      %43 = vector.broadcast %cst_28 : f32 to vector<128x128xf32>
      %44 = arith.maximumf %42, %43 : vector<128x128xf32>
      %45 = arith.truncf %44 : vector<128x128xf32> to vector<128x128xbf16>
      %c0_29 = arith.constant 0 : index
      %c0_30 = arith.constant 0 : index
      %46 = vector.load %arg9[%c0_29, %c0_30] : memref<128x128xbf16, #tpu.memory_space<vmem>>, vector<128x128xbf16>
      tpu.vector_store %arg9[%c0_29, %c0_30], %45 {strides = array<i32>} : memref<128x128xbf16, #tpu.memory_space<vmem>>, vector<128x128xbf16>,
      %cst_31 = arith.constant 0xFF800000 : f32
      %47 = vector.broadcast %cst_31 : f32 to vector<128x1xf32>
      %c0_32 = arith.constant 0 : index
      %c0_33 = arith.constant 0 : index
      %48 = vector.load %arg10[%c0_32, %c0_33] : memref<128x1xf32, #tpu.memory_space<vmem>>, vector<128x1xf32>
      tpu.vector_store %arg10[%c0_32, %c0_33], %47 {strides = array<i32>} : memref<128x1xf32, #tpu.memory_space<vmem>>, vector<128x1xf32>,
      %cst_34 = arith.constant 0.000000e+00 : f32
      %49 = vector.broadcast %cst_34 : f32 to vector<128x1xf32>
      %c0_35 = arith.constant 0 : index
      %c0_36 = arith.constant 0 : index
      %50 = vector.load %arg11[%c0_35, %c0_36] : memref<128x1xf32, #tpu.memory_space<vmem>>, vector<128x1xf32>
      tpu.vector_store %arg11[%c0_35, %c0_36], %49 {strides = array<i32>} : memref<128x1xf32, #tpu.memory_space<vmem>>, vector<128x1xf32>,
    } else {
    }
    %c0 = arith.constant 0 : index
    %c0_1 = arith.constant 0 : index
    %3 = vector.load %arg9[%c0, %c0_1] : memref<128x128xbf16, #tpu.memory_space<vmem>>, vector<128x128xbf16>
    %c0_2 = arith.constant 0 : index
    %c0_3 = arith.constant 0 : index
    %4 = vector.load %arg5[%c0_2, %c0_3] : memref<128x128xbf16, #tpu.memory_space<vmem>>, vector<128x128xbf16>
    %cst = arith.constant dense<0.000000e+00> : vector<128x128xf32>
    %5 = tpu.matmul %3, %4, %cst {dimension_numbers = #tpu.dot_dimension_numbers<[1], [0], [0], [1], [0, 0, 1, 1], [], []>} : vector<128x128xbf16>, vector<128x128xbf16>, vector<128x128xf32> -> vector<128x128xf32>
    %c0_4 = arith.constant 0 : index
    %c0_5 = arith.constant 0 : index
    %6 = vector.load %arg6[%c0_4, %c0_5] : memref<1x128xf32, #tpu.memory_space<vmem>>, vector<1x128xf32>
    %7 = vector.broadcast %6 : vector<1x128xf32> to vector<128x128xf32>
    %8 = arith.addf %5, %7 : vector<128x128xf32>
    %c128_i32 = arith.constant 128 : i32
    %9 = arith.muli %arg1, %c128_i32 : i32
    %10 = tpu.iota {dimensions = array<i32: 1>} : vector<128x128xi32>
    %11 = vector.broadcast %9 : i32 to vector<128x128xi32>
    %12 = arith.addi %11, %10 : vector<128x128xi32>
    %c49_i32 = arith.constant 49 : i32
    %13 = vector.broadcast %c49_i32 : i32 to vector<128x128xi32>
    %14 = arith.cmpi slt, %12, %13 : vector<128x128xi32>
    %cst_6 = arith.constant 0xFF800000 : f32
    %15 = vector.broadcast %cst_6 : f32 to vector<128x128xf32>
    %16 = arith.select %14, %8, %15 : vector<128x128xi1>, vector<128x128xf32>
    %c0_7 = arith.constant 0 : index
    %c0_8 = arith.constant 0 : index
    %17 = vector.load %arg7[%c0_7, %c0_8] : memref<128x128xf32, #tpu.memory_space<vmem>>, vector<128x128xf32>
    tpu.vector_store %arg7[%c0_7, %c0_8], %16 {strides = array<i32>} : memref<128x128xf32, #tpu.memory_space<vmem>>, vector<128x128xf32>,
    %c0_9 = arith.constant 0 : index
    %c0_10 = arith.constant 0 : index
    %18 = vector.load %arg10[%c0_9, %c0_10] : memref<128x1xf32, #tpu.memory_space<vmem>>, vector<128x1xf32>
    %cst_11 = arith.constant dense<0xFF800000> : vector<128xf32>
    %19 = vector.multi_reduction <maximumf>, %16, %cst_11 [1] : vector<128x128xf32> to vector<128xf32>
    %20 = vector.shape_cast %19 : vector<128xf32> to vector<128x1xf32>
    %21 = arith.maximumf %18, %20 : vector<128x1xf32>
    %22 = arith.subf %18, %21 : vector<128x1xf32>
    %23 = math.exp %22 : vector<128x1xf32>
    %c0_12 = arith.constant 0 : index
    %c0_13 = arith.constant 0 : index
    %24 = vector.load %arg11[%c0_12, %c0_13] : memref<128x1xf32, #tpu.memory_space<vmem>>, vector<128x1xf32>
    %25 = arith.mulf %23, %24 : vector<128x1xf32>
    %26 = vector.broadcast %21 : vector<128x1xf32> to vector<128x128xf32>
    %27 = arith.subf %16, %26 : vector<128x128xf32>
    %28 = math.exp %27 : vector<128x128xf32>
    %cst_14 = arith.constant dense<0.000000e+00> : vector<128xf32>
    %29 = vector.multi_reduction <add>, %28, %cst_14 [1] : vector<128x128xf32> to vector<128xf32>
    %30 = vector.shape_cast %29 : vector<128xf32> to vector<128x1xf32>
    %31 = arith.addf %25, %30 : vector<128x1xf32>
    %c0_15 = arith.constant 0 : index
    %c0_16 = arith.constant 0 : index
    %32 = vector.load %arg11[%c0_15, %c0_16] : memref<128x1xf32, #tpu.memory_space<vmem>>, vector<128x1xf32>
    tpu.vector_store %arg11[%c0_15, %c0_16], %31 {strides = array<i32>} : memref<128x1xf32, #tpu.memory_space<vmem>>, vector<128x1xf32>,
    %c0_17 = arith.constant 0 : index
    %c0_18 = arith.constant 0 : index
    %33 = vector.load %arg10[%c0_17, %c0_18] : memref<128x1xf32, #tpu.memory_space<vmem>>, vector<128x1xf32>
    tpu.vector_store %arg10[%c0_17, %c0_18], %21 {strides = array<i32>} : memref<128x1xf32, #tpu.memory_space<vmem>>, vector<128x1xf32>,
    %c0_i32_19 = arith.constant 0 : i32
    %34 = arith.cmpi eq, %arg1, %c0_i32_19 : i32
    %35 = arith.extui %34 : i1 to i32
    %c0_i32_20 = arith.constant 0 : i32
    %36 = arith.cmpi ne, %35, %c0_i32_20 : i32
    scf.if %36 {
      %c0_21 = arith.constant 0 : index
      %c0_22 = arith.constant 0 : index
      %37 = vector.load %arg10[%c0_21, %c0_22] : memref<128x1xf32, #tpu.memory_space<vmem>>, vector<128x1xf32>
      %c0_23 = arith.constant 0 : index
      %c0_24 = arith.constant 0 : index
      %38 = vector.load %arg11[%c0_23, %c0_24] : memref<128x1xf32, #tpu.memory_space<vmem>>, vector<128x1xf32>
      %39 = math.log %38 : vector<128x1xf32>
      %40 = arith.addf %37, %39 : vector<128x1xf32>
      %c0_25 = arith.constant 0 : index
      %c0_26 = arith.constant 0 : index
      %41 = vector.load %arg8[%c0_25, %c0_26] : memref<128x1xf32, #tpu.memory_space<vmem>>, vector<128x1xf32>
      tpu.vector_store %arg8[%c0_25, %c0_26], %40 {strides = array<i32>} : memref<128x1xf32, #tpu.memory_space<vmem>>, vector<128x1xf32>,
    } else {
    }
    return
  }
  func.func @transform_0(%arg0: i32, %arg1: i32) -> (i32, i32) {
    %c0_i32 = arith.constant 0 : i32
    %c0_i32_0 = arith.constant 0 : i32
    return %arg0, %c0_i32 : i32, i32
  }
  func.func @transform_1(%arg0: i32, %arg1: i32) -> (i32, i32) {
    %c0_i32 = arith.constant 0 : i32
    %c0_i32_0 = arith.constant 0 : i32
    %c0_i32_1 = arith.constant 0 : i32
    return %c0_i32, %c0_i32_0 : i32, i32
  }
  func.func @transform_2(%arg0: i32, %arg1: i32) -> (i32, i32) {
    %c0_i32 = arith.constant 0 : i32
    %c0_i32_0 = arith.constant 0 : i32
    %c0_i32_1 = arith.constant 0 : i32
    return %c0_i32, %c0_i32_0 : i32, i32
  }
  func.func @transform_3(%arg0: i32, %arg1: i32) -> (i32, i32) {
    %c0_i32 = arith.constant 0 : i32
    %c0_i32_0 = arith.constant 0 : i32
    return %c0_i32, %arg1 : i32, i32
  }
  func.func @transform_4(%arg0: i32, %arg1: i32) -> (i32, i32) {
    %c0_i32 = arith.constant 0 : i32
    %c0_i32_0 = arith.constant 0 : i32
    return %c0_i32, %arg1 : i32, i32
  }
  func.func @transform_5(%arg0: i32, %arg1: i32) -> (i32, i32) {
    %c0_i32 = arith.constant 0 : i32
    return %arg0, %arg1 : i32, i32
  }
  func.func @transform_6(%arg0: i32, %arg1: i32) -> (i32, i32) {
    %c0_i32 = arith.constant 0 : i32
    %c0_i32_0 = arith.constant 0 : i32
    return %arg0, %c0_i32 : i32, i32
  }
}

</mosaic_0001>

<llo_original>
// kernel: ngram_forward_pallas.1
$region0: #{ngram_forward_pallas.1}
  #allocation0 [shape = 'u32[]', space=smem, size = 0x4, offset = 0x4, fixed_abs, tag = 'smem constant byte address 0x4 - core index']
  #allocation1 [shape = 'u32[144,128]{1,0:T(1,128)}', space=vmem, size = 0x12000, scoped, tag = 'internal scratch']
  #allocation2 [shape = 'bf16[128,128]{1,0:T(8,128)(2,1)}', space=vmem, size = 0x8000, scoped, tag = 'scratch operand']
  #allocation3 [shape = 'f32[128,1]{1,0:T(8,128)}', space=vmem, size = 0x10000, scoped, tag = 'scratch operand']
  #allocation4 [shape = 'f32[128,1]{1,0:T(8,128)}', space=vmem, size = 0x10000, scoped, tag = 'scratch operand']
  %s0 = inlined_call_operand.vmem [shape: bf16[128,20], index: 0, kind: input, shape index: {}]
  %s1 = inlined_call_operand.vmem [shape: bf16[20,128], index: 1, kind: input, shape index: {}]
  %s2 = inlined_call_operand.vmem [shape: f32[1,128], index: 2, kind: input, shape index: {}]
  %s3 = inlined_call_operand.vmem [shape: bf16[128,128], index: 3, kind: input, shape index: {}]
  %s4 = inlined_call_operand.vmem [shape: f32[1,128], index: 4, kind: input, shape index: {}]
  %s5 = inlined_call_operand.vmem [shape: f32[128,128], index: 5, kind: output, shape index: {0}]
  %s6 = inlined_call_operand.vmem [shape: f32[128,1], index: 6, kind: output, shape index: {1}]
  %7 = xla_tuple %s5, %s6
  %s8 = sld [smem:[#allocation0]]
  $region46: #{ngram_forward_pallas.1} parent=0
    _
  %s10 = ssub.s32 1, %s8
  %s11 = scalar_select 0, %s10, %s8
  // Predicated region
  $region2: #{ngram_forward_pallas.1} parent=0 // pred_check
    _
  $region3: #{ngram_forward_pallas.1} parent=0 // pred_check_branch
    %13 = sbr.rel (0) target = $region5
  $region4: #{ngram_forward_pallas.1} parent=0 // pred_region
    _
  $region5: #{ngram_forward_pallas.1} parent=0 // pred_fallthru
    _
  // Predicated region
  $region6: #{ngram_forward_pallas.1} parent=0 // pred_check
    _
  $region7: #{ngram_forward_pallas.1} parent=0 // pred_check_branch
    %15 = sbr.rel (0) target = $region9
  $region8: #{ngram_forward_pallas.1} parent=0 // pred_region
    _
  $region9: #{ngram_forward_pallas.1} parent=0 // pred_fallthru
    _
  // Predicated region
  $region10: #{ngram_forward_pallas.1} parent=0 // pred_check
    _
  $region11: #{ngram_forward_pallas.1} parent=0 // pred_check_branch
    %17 = sbr.rel (0) target = $region13
  $region12: #{ngram_forward_pallas.1} parent=0 // pred_region
    _
  $region13: #{ngram_forward_pallas.1} parent=0 // pred_fallthru
    _
  // Predicated region
  $region14: #{ngram_forward_pallas.1} parent=0 // pred_check
    _
  $region15: #{ngram_forward_pallas.1} parent=0 // pred_check_branch
    %19 = sbr.rel (0) target = $region17
  $region16: #{ngram_forward_pallas.1} parent=0 // pred_region
    _
  $region17: #{ngram_forward_pallas.1} parent=0 // pred_fallthru
    _
  // Predicated region
  $region18: #{ngram_forward_pallas.1} parent=0 // pred_check
    _
  $region19: #{ngram_forward_pallas.1} parent=0 // pred_check_branch
    %21 = sbr.rel (0) target = $region21
  $region20: #{ngram_forward_pallas.1} parent=0 // pred_region
    _
  $region21: #{ngram_forward_pallas.1} parent=0 // pred_fallthru
    _
  %p23 = scmp.eq.s32.totalorder 0, 0
  // Predicated region
  $region22: #{ngram_forward_pallas.1} parent=0 // pred_check
    %p24 = pneg %p23
  $region23: #{ngram_forward_pallas.1} parent=0 // pred_check_branch
    %26 = sbr.rel (%p24) target = $region25
  $region24: #{ngram_forward_pallas.1} parent=0 // pred_region
    %v27 = vld [vmem:[%s0] sm:$0xf]
    %v28 = vld [vmem:[%s0 + $0x4] sm:$0xf]
    %v29 = vld [vmem:[%s0 + $0x8] sm:$0xf]
    %v30 = vld [vmem:[%s0 + $0xc] sm:$0xf]
    %v31 = vld [vmem:[%s0 + $0x10] sm:$0xf]
    %v32 = vld [vmem:[%s0 + $0x14] sm:$0xf]
    %v33 = vld [vmem:[%s0 + $0x18] sm:$0xf]
    %v34 = vld [vmem:[%s0 + $0x1c] sm:$0xf]
    %v35 = vld [vmem:[%s0 + $0x20] sm:$0xf]
    %v36 = vld [vmem:[%s0 + $0x24] sm:$0xf]
    %v37 = vld [vmem:[%s0 + $0x28] sm:$0xf]
    %v38 = vld [vmem:[%s0 + $0x2c] sm:$0xf]
    %v39 = vld [vmem:[%s0 + $0x30] sm:$0xf]
    %v40 = vld [vmem:[%s0 + $0x34] sm:$0xf]
    %v41 = vld [vmem:[%s0 + $0x38] sm:$0xf]
    %v42 = vld [vmem:[%s0 + $0x3c] sm:$0xf]
    %v43 = vld [vmem:[%s1] sm:$0xf]
    %v44 = vld [vmem:[%s1 + $0x4] sm:$0xf]
    %v45 = vld [vmem:[%s1 + $0x8] sm:$0x3]
    %v46 = vld [vmem:[%s2] sm:$0x1]
    %v48 = vlaneseq
    %v49 = vshrl.u32 %v48, 7
    %v50 = vsub.s32 0, %v49
    %v51 = vrot.slane %v46, %v50
    %v69 = vunpack.c.l.b16 %v27
    %v70 = vunpack.c.l.b16 %v28
    %v71 = vunpack.c.l.b16 %v29
    %v72 = vunpack.c.l.b16 %v30
    %v73 = vunpack.c.l.b16 %v31
    %v74 = vunpack.c.l.b16 %v32
    %v75 = vunpack.c.l.b16 %v33
    %v76 = vunpack.c.l.b16 %v34
    %v77 = vunpack.c.l.b16 %v35
    %v78 = vunpack.c.l.b16 %v36
    %v79 = vunpack.c.l.b16 %v37
    %v80 = vunpack.c.l.b16 %v38
    %v81 = vunpack.c.l.b16 %v39
    %v82 = vunpack.c.l.b16 %v40
    %v83 = vunpack.c.l.b16 %v41
    %v84 = vunpack.c.l.b16 %v42
    %v85 = vpack.c.b16 %v70, %v69
    %v86 = vpack.c.b16 %v72, %v71
    %v87 = vpack.c.b16 %v74, %v73
    %v88 = vpack.c.b16 %v76, %v75
    %v89 = vpack.c.b16 %v78, %v77
    %v90 = vpack.c.b16 %v80, %v79
    %v91 = vpack.c.b16 %v82, %v81
    %v92 = vpack.c.b16 %v84, %v83
    %v96 = vunpack.c.l.b16 %v43
    %v97 = vunpack.c.l.b16 %v44
    %v98 = vunpack.c.l.b16 %v45
    %v99 = vpack.c.b16 %v97, %v96
    %v100 = vpack.c.b16 %v98, %v98
    %vm102 = vcmask 162816
    %v104 = vsel %vm102, %v85, 0
    %v107 = vsel %vm102, %v86, 0
    %v110 = vsel %vm102, %v87, 0
    %v113 = vsel %vm102, %v88, 0
    %v116 = vsel %vm102, %v89, 0
    %v119 = vsel %vm102, %v90, 0
    %v122 = vsel %vm102, %v91, 0
    %v125 = vsel %vm102, %v92, 0
    %vm127 = vcmask 1041408
    %v129 = vsel %vm127, %v100, 0
    %131 = vmatprep.subr.bf16.mxu0 0
    %132 = vmatpush1.bf16.msra.mxu0 0
    %133 = vmatprep.subr.bf16.mxu0 0
    %134 = vmatpush1.bf16.msra.mxu0 0
    %135 = vmatprep.subr.bf16.mxu0 0
    %136 = vmatpush1.bf16.msra.mxu0 0
    %137 = vmatprep.subr.bf16.mxu0 0
    %138 = vmatpush1.bf16.msra.mxu0 0
    %139 = vmatprep.subr.bf16.mxu0 0
    %140 = vmatpush1.bf16.msra.mxu0 0
    %141 = vmatprep.subr.bf16.mxu0 0
    %142 = vmatpush1.bf16.msra.mxu0 0
    %143 = vmatprep.subr.bf16.mxu0 0
    %144 = vmatpush1.bf16.msra.mxu0 %v129
    %145 = vmatprep.subr.bf16.mxu0 0
    %146 = vmatpush1.bf16.msra.mxu0 %v99
    %147 = vmatprep.subr.bf16.mxu0 0
    %148 = vmatpush2.bf16.msra.mxu0 0
    %149 = vmatprep.subr.bf16.mxu0 0
    %150 = vmatpush2.bf16.msra.mxu0 0
    %151 = vmatprep.subr.bf16.mxu0 0
    %152 = vmatpush2.bf16.msra.mxu0 0
    %153 = vmatprep.subr.bf16.mxu0 0
    %154 = vmatpush2.bf16.msra.mxu0 0
    %155 = vmatprep.subr.bf16.mxu0 0
    %156 = vmatpush2.bf16.msra.mxu0 0
    %157 = vmatprep.subr.bf16.mxu0 0
    %158 = vmatpush2.bf16.msra.mxu0 0
    %159 = vmatprep.subr.bf16.mxu0 0
    %160 = vmatpush2.bf16.msra.mxu0 0
    %161 = vmatprep.subr.bf16.mxu0 0
    %162 = vmatpush2.bf16.msra.mxu0 0
    %163 = vmatprep.mubr.bf16.mxu0 0
    %164 = vmatmul.mubr.bf16.gmra.mxu0 %v104
    %v165 = vpop.f32.mrf.mxu0
    %v166 = vadd.f32 %v51, %v165
    %v167 = vpop.f32.mrf.mxu0
    %v168 = vpop.f32.mrf.mxu0
    %v169 = vadd.f32 %v51, %v168
    %v170 = vpop.f32.mrf.mxu0
    %171 = vmatprep.mubr.bf16.mxu0 0
    %172 = vmatmul.mubr.bf16.gmra.mxu0 %v107
    %v173 = vpop.f32.mrf.mxu0
    %v174 = vadd.f32 %v51, %v173
    %v175 = vpop.f32.mrf.mxu0
    %v176 = vpop.f32.mrf.mxu0
    %v177 = vadd.f32 %v51, %v176
    %v178 = vpop.f32.mrf.mxu0
    %179 = vmatprep.mubr.bf16.mxu0 0
    %180 = vmatmul.mubr.bf16.gmra.mxu0 %v110
    %v181 = vpop.f32.mrf.mxu0
    %v182 = vadd.f32 %v51, %v181
    %v183 = vpop.f32.mrf.mxu0
    %v184 = vpop.f32.mrf.mxu0
    %v185 = vadd.f32 %v51, %v184
    %v186 = vpop.f32.mrf.mxu0
    %187 = vmatprep.mubr.bf16.mxu0 0
    %188 = vmatmul.mubr.bf16.gmra.mxu0 %v113
    %v189 = vpop.f32.mrf.mxu0
    %v190 = vadd.f32 %v51, %v189
    %v191 = vpop.f32.mrf.mxu0
    %v192 = vpop.f32.mrf.mxu0
    %v193 = vadd.f32 %v51, %v192
    %v194 = vpop.f32.mrf.mxu0
    %195 = vmatprep.mubr.bf16.mxu0 0
    %196 = vmatmul.mubr.bf16.gmra.mxu0 %v116
    %v197 = vpop.f32.mrf.mxu0
    %v198 = vadd.f32 %v51, %v197
    %v199 = vpop.f32.mrf.mxu0
    %v200 = vpop.f32.mrf.mxu0
    %v201 = vadd.f32 %v51, %v200
    %v202 = vpop.f32.mrf.mxu0
    %203 = vmatprep.mubr.bf16.mxu0 0
    %204 = vmatmul.mubr.bf16.gmra.mxu0 %v119
    %v205 = vpop.f32.mrf.mxu0
    %v206 = vadd.f32 %v51, %v205
    %v207 = vpop.f32.mrf.mxu0
    %v208 = vpop.f32.mrf.mxu0
    %v209 = vadd.f32 %v51, %v208
    %v210 = vpop.f32.mrf.mxu0
    %211 = vmatprep.mubr.bf16.mxu0 0
    %212 = vmatmul.mubr.bf16.gmra.mxu0 %v122
    %v213 = vpop.f32.mrf.mxu0
    %v214 = vadd.f32 %v51, %v213
    %v215 = vpop.f32.mrf.mxu0
    %v216 = vpop.f32.mrf.mxu0
    %v217 = vadd.f32 %v51, %v216
    %v218 = vpop.f32.mrf.mxu0
    %219 = vmatprep.mubr.bf16.mxu0 0
    %220 = vmatmul.mubr.bf16.gmra.mxu0 %v125
    %v221 = vpop.f32.mrf.mxu0
    %v222 = vadd.f32 %v51, %v221
    %v223 = vpop.f32.mrf.mxu0
    %v224 = vpop.f32.mrf.mxu0
    %v225 = vadd.f32 %v51, %v224
    %v226 = vpop.f32.mrf.mxu0
    %227 = vdwg.mxu0
    %v228 = vmax.f32 %v166, 0.0
    %v229 = vmax.f32 %v169, 0.0
    %v230 = vmax.f32 %v174, 0.0
    %v231 = vmax.f32 %v177, 0.0
    %v232 = vmax.f32 %v182, 0.0
    %v233 = vmax.f32 %v185, 0.0
    %v234 = vmax.f32 %v190, 0.0
    %v235 = vmax.f32 %v193, 0.0
    %v236 = vmax.f32 %v198, 0.0
    %v237 = vmax.f32 %v201, 0.0
    %v238 = vmax.f32 %v206, 0.0
    %v239 = vmax.f32 %v209, 0.0
    %v240 = vmax.f32 %v214, 0.0
    %v241 = vmax.f32 %v217, 0.0
    %v242 = vmax.f32 %v222, 0.0
    %v243 = vmax.f32 %v225, 0.0
    %v244 = vpack.c.bf16 %v229, %v228
    %v245 = vpack.c.bf16 %v231, %v230
    %v246 = vpack.c.bf16 %v233, %v232
    %v247 = vpack.c.bf16 %v235, %v234
    %v248 = vpack.c.bf16 %v237, %v236
    %v249 = vpack.c.bf16 %v239, %v238
    %v250 = vpack.c.bf16 %v241, %v240
    %v251 = vpack.c.bf16 %v243, %v242
    %v260 = vunpack.c.l.b16 %v244
    %v261 = vunpack.c.h.b16 %v244
    %v262 = vunpack.c.l.b16 %v245
    %v263 = vunpack.c.h.b16 %v245
    %v264 = vunpack.c.l.b16 %v246
    %v265 = vunpack.c.h.b16 %v246
    %v266 = vunpack.c.l.b16 %v247
    %v267 = vunpack.c.h.b16 %v247
    %v268 = vunpack.c.l.b16 %v248
    %v269 = vunpack.c.h.b16 %v248
    %v270 = vunpack.c.l.b16 %v249
    %v271 = vunpack.c.h.b16 %v249
    %v272 = vunpack.c.l.b16 %v250
    %v273 = vunpack.c.h.b16 %v250
    %v274 = vunpack.c.l.b16 %v251
    %v275 = vunpack.c.h.b16 %v251
    %v276 = vpack.c.b16 %v260, %v260
    %v277 = vpack.c.b16 %v261, %v261
    %v278 = vpack.c.b16 %v262, %v262
    %v279 = vpack.c.b16 %v263, %v263
    %v280 = vpack.c.b16 %v264, %v264
    %v281 = vpack.c.b16 %v265, %v265
    %v282 = vpack.c.b16 %v266, %v266
    %v283 = vpack.c.b16 %v267, %v267
    %v284 = vpack.c.b16 %v268, %v268
    %v285 = vpack.c.b16 %v269, %v269
    %v286 = vpack.c.b16 %v270, %v270
    %v287 = vpack.c.b16 %v271, %v271
    %v288 = vpack.c.b16 %v272, %v272
    %v289 = vpack.c.b16 %v273, %v273
    %v290 = vpack.c.b16 %v274, %v274
    %v291 = vpack.c.b16 %v275, %v275
    %308 = vst [vmem:[#allocation2] sm:$0xf] %v276
    %309 = vst [vmem:[#allocation2 + $0x4] sm:$0xf] %v277
    %310 = vst [vmem:[#allocation2 + $0x8] sm:$0xf] %v278
    %311 = vst [vmem:[#allocation2 + $0xc] sm:$0xf] %v279
    %312 = vst [vmem:[#allocation2 + $0x10] sm:$0xf] %v280
    %313 = vst [vmem:[#allocation2 + $0x14] sm:$0xf] %v281
    %314 = vst [vmem:[#allocation2 + $0x18] sm:$0xf] %v282
    %315 = vst [vmem:[#allocation2 + $0x1c] sm:$0xf] %v283
    %316 = vst [vmem:[#allocation2 + $0x20] sm:$0xf] %v284
    %317 = vst [vmem:[#allocation2 + $0x24] sm:$0xf] %v285
    %318 = vst [vmem:[#allocation2 + $0x28] sm:$0xf] %v286
    %319 = vst [vmem:[#allocation2 + $0x2c] sm:$0xf] %v287
    %320 = vst [vmem:[#allocation2 + $0x30] sm:$0xf] %v288
    %321 = vst [vmem:[#allocation2 + $0x34] sm:$0xf] %v289
    %322 = vst [vmem:[#allocation2 + $0x38] sm:$0xf] %v290
    %323 = vst [vmem:[#allocation2 + $0x3c] sm:$0xf] %v291
    %vm324 = vcmask 7168
    %325 = vst.msk [vmem:[#allocation3] sm:$0xff] %vm324, -inf
    %326 = vst.msk [vmem:[#allocation3 + $0x8] sm:$0xff] %vm324, -inf
    %327 = vst.msk [vmem:[#allocation3 + $0x10] sm:$0xff] %vm324, -inf
    %328 = vst.msk [vmem:[#allocation3 + $0x18] sm:$0xff] %vm324, -inf
    %329 = vst.msk [vmem:[#allocation3 + $0x20] sm:$0xff] %vm324, -inf
    %330 = vst.msk [vmem:[#allocation3 + $0x28] sm:$0xff] %vm324, -inf
    %331 = vst.msk [vmem:[#allocation3 + $0x30] sm:$0xff] %vm324, -inf
    %332 = vst.msk [vmem:[#allocation3 + $0x38] sm:$0xff] %vm324, -inf
    %333 = vst.msk [vmem:[#allocation3 + $0x40] sm:$0xff] %vm324, -inf
    %334 = vst.msk [vmem:[#allocation3 + $0x48] sm:$0xff] %vm324, -inf
    %335 = vst.msk [vmem:[#allocation3 + $0x50] sm:$0xff] %vm324, -inf
    %336 = vst.msk [vmem:[#allocation3 + $0x58] sm:$0xff] %vm324, -inf
    %337 = vst.msk [vmem:[#allocation3 + $0x60] sm:$0xff] %vm324, -inf
    %338 = vst.msk [vmem:[#allocation3 + $0x68] sm:$0xff] %vm324, -inf
    %339 = vst.msk [vmem:[#allocation3 + $0x70] sm:$0xff] %vm324, -inf
    %340 = vst.msk [vmem:[#allocation3 + $0x78] sm:$0xff] %vm324, -inf
    %341 = vst.msk [vmem:[#allocation4] sm:$0xff] %vm324, 0.0
    %342 = vst.msk [vmem:[#allocation4 + $0x8] sm:$0xff] %vm324, 0.0
    %343 = vst.msk [vmem:[#allocation4 + $0x10] sm:$0xff] %vm324, 0.0
    %344 = vst.msk [vmem:[#allocation4 + $0x18] sm:$0xff] %vm324, 0.0
    %345 = vst.msk [vmem:[#allocation4 + $0x20] sm:$0xff] %vm324, 0.0
    %346 = vst.msk [vmem:[#allocation4 + $0x28] sm:$0xff] %vm324, 0.0
    %347 = vst.msk [vmem:[#allocation4 + $0x30] sm:$0xff] %vm324, 0.0
    %348 = vst.msk [vmem:[#allocation4 + $0x38] sm:$0xff] %vm324, 0.0
    %349 = vst.msk [vmem:[#allocation4 + $0x40] sm:$0xff] %vm324, 0.0
    %350 = vst.msk [vmem:[#allocation4 + $0x48] sm:$0xff] %vm324, 0.0
    %351 = vst.msk [vmem:[#allocation4 + $0x50] sm:$0xff] %vm324, 0.0
    %352 = vst.msk [vmem:[#allocation4 + $0x58] sm:$0xff] %vm324, 0.0
    %353 = vst.msk [vmem:[#allocation4 + $0x60] sm:$0xff] %vm324, 0.0
    %354 = vst.msk [vmem:[#allocation4 + $0x68] sm:$0xff] %vm324, 0.0
    %355 = vst.msk [vmem:[#allocation4 + $0x70] sm:$0xff] %vm324, 0.0
    %356 = vst.msk [vmem:[#allocation4 + $0x78] sm:$0xff] %vm324, 0.0
  $region25: #{ngram_forward_pallas.1} parent=0 // pred_fallthru
    _
  %v357 = vld [vmem:[#allocation2] sm:$0xf]
  %v358 = vld [vmem:[#allocation2 + $0x4] sm:$0xf]
  %v359 = vld [vmem:[#allocation2 + $0x8] sm:$0xf]
  %v360 = vld [vmem:[#allocation2 + $0xc] sm:$0xf]
  %v361 = vld [vmem:[#allocation2 + $0x10] sm:$0xf]
  %v362 = vld [vmem:[#allocation2 + $0x14] sm:$0xf]
  %v363 = vld [vmem:[#allocation2 + $0x18] sm:$0xf]
  %v364 = vld [vmem:[#allocation2 + $0x1c] sm:$0xf]
  %v365 = vld [vmem:[#allocation2 + $0x20] sm:$0xf]
  %v366 = vld [vmem:[#allocation2 + $0x24] sm:$0xf]
  %v367 = vld [vmem:[#allocation2 + $0x28] sm:$0xf]
  %v368 = vld [vmem:[#allocation2 + $0x2c] sm:$0xf]
  %v369 = vld [vmem:[#allocation2 + $0x30] sm:$0xf]
  %v370 = vld [vmem:[#allocation2 + $0x34] sm:$0xf]
  %v371 = vld [vmem:[#allocation2 + $0x38] sm:$0xf]
  %v372 = vld [vmem:[#allocation2 + $0x3c] sm:$0xf]
  %v373 = vld [vmem:[%s3] sm:$0xf]
  %v374 = vld [vmem:[%s3 + $0x4] sm:$0xf]
  %v375 = vld [vmem:[%s3 + $0x8] sm:$0xf]
  %v376 = vld [vmem:[%s3 + $0xc] sm:$0xf]
  %v377 = vld [vmem:[%s3 + $0x10] sm:$0xf]
  %v378 = vld [vmem:[%s3 + $0x14] sm:$0xf]
  %v379 = vld [vmem:[%s3 + $0x18] sm:$0xf]
  %v380 = vld [vmem:[%s3 + $0x1c] sm:$0xf]
  %v381 = vld [vmem:[%s3 + $0x20] sm:$0xf]
  %v382 = vld [vmem:[%s3 + $0x24] sm:$0xf]
  %v383 = vld [vmem:[%s3 + $0x28] sm:$0xf]
  %v384 = vld [vmem:[%s3 + $0x2c] sm:$0xf]
  %v385 = vld [vmem:[%s3 + $0x30] sm:$0xf]
  %v386 = vld [vmem:[%s3 + $0x34] sm:$0xf]
  %v387 = vld [vmem:[%s3 + $0x38] sm:$0xf]
  %v388 = vld [vmem:[%s3 + $0x3c] sm:$0xf]
  %v389 = vld [vmem:[%s4] sm:$0x1]
  %v391 = vlaneseq
  %v392 = vshrl.u32 %v391, 7
  %v393 = vsub.s32 0, %v392
  %v394 = vrot.slane %v389, %v393
  %v412 = vunpack.c.l.b16 %v357
  %v413 = vunpack.c.l.b16 %v358
  %v414 = vunpack.c.l.b16 %v359
  %v415 = vunpack.c.l.b16 %v360
  %v416 = vunpack.c.l.b16 %v361
  %v417 = vunpack.c.l.b16 %v362
  %v418 = vunpack.c.l.b16 %v363
  %v419 = vunpack.c.l.b16 %v364
  %v420 = vunpack.c.l.b16 %v365
  %v421 = vunpack.c.l.b16 %v366
  %v422 = vunpack.c.l.b16 %v367
  %v423 = vunpack.c.l.b16 %v368
  %v424 = vunpack.c.l.b16 %v369
  %v425 = vunpack.c.l.b16 %v370
  %v426 = vunpack.c.l.b16 %v371
  %v427 = vunpack.c.l.b16 %v372
  %v428 = vpack.c.b16 %v413, %v412
  %v429 = vpack.c.b16 %v415, %v414
  %v430 = vpack.c.b16 %v417, %v416
  %v431 = vpack.c.b16 %v419, %v418
  %v432 = vpack.c.b16 %v421, %v420
  %v433 = vpack.c.b16 %v423, %v422
  %v434 = vpack.c.b16 %v425, %v424
  %v435 = vpack.c.b16 %v427, %v426
  %v460 = vunpack.c.l.b16 %v373
  %v461 = vunpack.c.l.b16 %v374
  %v462 = vunpack.c.l.b16 %v375
  %v463 = vunpack.c.l.b16 %v376
  %v464 = vunpack.c.l.b16 %v377
  %v465 = vunpack.c.l.b16 %v378
  %v466 = vunpack.c.l.b16 %v379
  %v467 = vunpack.c.l.b16 %v380
  %v468 = vunpack.c.l.b16 %v381
  %v469 = vunpack.c.l.b16 %v382
  %v470 = vunpack.c.l.b16 %v383
  %v471 = vunpack.c.l.b16 %v384
  %v472 = vunpack.c.l.b16 %v385
  %v473 = vunpack.c.l.b16 %v386
  %v474 = vunpack.c.l.b16 %v387
  %v475 = vunpack.c.l.b16 %v388
  %v476 = vpack.c.b16 %v461, %v460
  %v477 = vpack.c.b16 %v463, %v462
  %v478 = vpack.c.b16 %v465, %v464
  %v479 = vpack.c.b16 %v467, %v466
  %v480 = vpack.c.b16 %v469, %v468
  %v481 = vpack.c.b16 %v471, %v470
  %v482 = vpack.c.b16 %v473, %v472
  %v483 = vpack.c.b16 %v475, %v474
  %492 = vmatprep.subr.bf16.mxu0 0
  %493 = vmatpush1.bf16.msra.mxu0 %v483
  %494 = vmatprep.subr.bf16.mxu0 0
  %495 = vmatpush1.bf16.msra.mxu0 %v482
  %496 = vmatprep.subr.bf16.mxu0 0
  %497 = vmatpush1.bf16.msra.mxu0 %v481
  %498 = vmatprep.subr.bf16.mxu0 0
  %499 = vmatpush1.bf16.msra.mxu0 %v480
  %500 = vmatprep.subr.bf16.mxu0 0
  %501 = vmatpush1.bf16.msra.mxu0 %v479
  %502 = vmatprep.subr.bf16.mxu0 0
  %503 = vmatpush1.bf16.msra.mxu0 %v478
  %504 = vmatprep.subr.bf16.mxu0 0
  %505 = vmatpush1.bf16.msra.mxu0 %v477
  %506 = vmatprep.subr.bf16.mxu0 0
  %507 = vmatpush1.bf16.msra.mxu0 %v476
  %508 = vmatprep.subr.bf16.mxu0 0
  %509 = vmatpush2.bf16.msra.mxu0 0
  %510 = vmatprep.subr.bf16.mxu0 0
  %511 = vmatpush2.bf16.msra.mxu0 0
  %512 = vmatprep.subr.bf16.mxu0 0
  %513 = vmatpush2.bf16.msra.mxu0 0
  %514 = vmatprep.subr.bf16.mxu0 0
  %515 = vmatpush2.bf16.msra.mxu0 0
  %516 = vmatprep.subr.bf16.mxu0 0
  %517 = vmatpush2.bf16.msra.mxu0 0
  %518 = vmatprep.subr.bf16.mxu0 0
  %519 = vmatpush2.bf16.msra.mxu0 0
  %520 = vmatprep.subr.bf16.mxu0 0
  %521 = vmatpush2.bf16.msra.mxu0 0
  %522 = vmatprep.subr.bf16.mxu0 0
  %523 = vmatpush2.bf16.msra.mxu0 0
  %524 = vmatprep.mubr.bf16.mxu0 0
  %525 = vmatmul.mubr.bf16.gmra.mxu0 %v428
  %v526 = vpop.f32.mrf.mxu0
  %v527 = vadd.f32 %v394, %v526
  %v528 = vpop.f32.mrf.mxu0
  %v529 = vpop.f32.mrf.mxu0
  %v530 = vadd.f32 %v394, %v529
  %v531 = vpop.f32.mrf.mxu0
  %532 = vmatprep.mubr.bf16.mxu0 0
  %533 = vmatmul.mubr.bf16.gmra.mxu0 %v429
  %v534 = vpop.f32.mrf.mxu0
  %v535 = vadd.f32 %v394, %v534
  %v536 = vpop.f32.mrf.mxu0
  %v537 = vpop.f32.mrf.mxu0
  %v538 = vadd.f32 %v394, %v537
  %v539 = vpop.f32.mrf.mxu0
  %540 = vmatprep.mubr.bf16.mxu0 0
  %541 = vmatmul.mubr.bf16.gmra.mxu0 %v430
  %v542 = vpop.f32.mrf.mxu0
  %v543 = vadd.f32 %v394, %v542
  %v544 = vpop.f32.mrf.mxu0
  %v545 = vpop.f32.mrf.mxu0
  %v546 = vadd.f32 %v394, %v545
  %v547 = vpop.f32.mrf.mxu0
  %548 = vmatprep.mubr.bf16.mxu0 0
  %549 = vmatmul.mubr.bf16.gmra.mxu0 %v431
  %v550 = vpop.f32.mrf.mxu0
  %v551 = vadd.f32 %v394, %v550
  %v552 = vpop.f32.mrf.mxu0
  %v553 = vpop.f32.mrf.mxu0
  %v554 = vadd.f32 %v394, %v553
  %v555 = vpop.f32.mrf.mxu0
  %556 = vmatprep.mubr.bf16.mxu0 0
  %557 = vmatmul.mubr.bf16.gmra.mxu0 %v432
  %v558 = vpop.f32.mrf.mxu0
  %v559 = vadd.f32 %v394, %v558
  %v560 = vpop.f32.mrf.mxu0
  %v561 = vpop.f32.mrf.mxu0
  %v562 = vadd.f32 %v394, %v561
  %v563 = vpop.f32.mrf.mxu0
  %564 = vmatprep.mubr.bf16.mxu0 0
  %565 = vmatmul.mubr.bf16.gmra.mxu0 %v433
  %v566 = vpop.f32.mrf.mxu0
  %v567 = vadd.f32 %v394, %v566
  %v568 = vpop.f32.mrf.mxu0
  %v569 = vpop.f32.mrf.mxu0
  %v570 = vadd.f32 %v394, %v569
  %v571 = vpop.f32.mrf.mxu0
  %572 = vmatprep.mubr.bf16.mxu0 0
  %573 = vmatmul.mubr.bf16.gmra.mxu0 %v434
  %v574 = vpop.f32.mrf.mxu0
  %v575 = vadd.f32 %v394, %v574
  %v576 = vpop.f32.mrf.mxu0
  %v577 = vpop.f32.mrf.mxu0
  %v578 = vadd.f32 %v394, %v577
  %v579 = vpop.f32.mrf.mxu0
  %580 = vmatprep.mubr.bf16.mxu0 0
  %581 = vmatmul.mubr.bf16.gmra.mxu0 %v435
  %v582 = vpop.f32.mrf.mxu0
  %v583 = vadd.f32 %v394, %v582
  %v584 = vpop.f32.mrf.mxu0
  %v585 = vpop.f32.mrf.mxu0
  %v586 = vadd.f32 %v394, %v585
  %v587 = vpop.f32.mrf.mxu0
  %588 = vdwg.mxu0
  %s589 = smul.u32 0, 128
  %v590 = vlaneseq
  %v591 = vand.u32 %v590, 127
  %v592 = vstv %s589
  %v593 = vadd.s32 %v592, %v591
  %vm594 = vcmp.lt.s32.totalorder %v593, 49
  %v595 = vsel %vm594, %v527, -inf
  %v596 = vsel %vm594, %v530, -inf
  %v597 = vsel %vm594, %v535, -inf
  %v598 = vsel %vm594, %v538, -inf
  %v599 = vsel %vm594, %v543, -inf
  %v600 = vsel %vm594, %v546, -inf
  %v601 = vsel %vm594, %v551, -inf
  %v602 = vsel %vm594, %v554, -inf
  %v603 = vsel %vm594, %v559, -inf
  %v604 = vsel %vm594, %v562, -inf
  %v605 = vsel %vm594, %v567, -inf
  %v606 = vsel %vm594, %v570, -inf
  %v607 = vsel %vm594, %v575, -inf
  %v608 = vsel %vm594, %v578, -inf
  %v609 = vsel %vm594, %v583, -inf
  %v610 = vsel %vm594, %v586, -inf
  %611 = vst [vmem:[%s5] sm:$0xff] %v595
  %612 = vst [vmem:[%s5 + $0x8] sm:$0xff] %v596
  %613 = vst [vmem:[%s5 + $0x10] sm:$0xff] %v597
  %614 = vst [vmem:[%s5 + $0x18] sm:$0xff] %v598
  %615 = vst [vmem:[%s5 + $0x20] sm:$0xff] %v599
  %616 = vst [vmem:[%s5 + $0x28] sm:$0xff] %v600
  %617 = vst [vmem:[%s5 + $0x30] sm:$0xff] %v601
  %618 = vst [vmem:[%s5 + $0x38] sm:$0xff] %v602
  %619 = vst [vmem:[%s5 + $0x40] sm:$0xff] %v603
  %620 = vst [vmem:[%s5 + $0x48] sm:$0xff] %v604
  %621 = vst [vmem:[%s5 + $0x50] sm:$0xff] %v605
  %622 = vst [vmem:[%s5 + $0x58] sm:$0xff] %v606
  %623 = vst [vmem:[%s5 + $0x60] sm:$0xff] %v607
  %624 = vst [vmem:[%s5 + $0x68] sm:$0xff] %v608
  %625 = vst [vmem:[%s5 + $0x70] sm:$0xff] %v609
  %626 = vst [vmem:[%s5 + $0x78] sm:$0xff] %v610
  %v627 = vld [vmem:[#allocation3] sm:$0xff]
  %v628 = vld [vmem:[#allocation3 + $0x8] sm:$0xff]
  %v629 = vld [vmem:[#allocation3 + $0x10] sm:$0xff]
  %v630 = vld [vmem:[#allocation3 + $0x18] sm:$0xff]
  %v631 = vld [vmem:[#allocation3 + $0x20] sm:$0xff]
  %v632 = vld [vmem:[#allocation3 + $0x28] sm:$0xff]
  %v633 = vld [vmem:[#allocation3 + $0x30] sm:$0xff]
  %v634 = vld [vmem:[#allocation3 + $0x38] sm:$0xff]
  %v635 = vld [vmem:[#allocation3 + $0x40] sm:$0xff]
  %v636 = vld [vmem:[#allocation3 + $0x48] sm:$0xff]
  %v637 = vld [vmem:[#allocation3 + $0x50] sm:$0xff]
  %v638 = vld [vmem:[#allocation3 + $0x58] sm:$0xff]
  %v639 = vld [vmem:[#allocation3 + $0x60] sm:$0xff]
  %v640 = vld [vmem:[#allocation3 + $0x68] sm:$0xff]
  %v641 = vld [vmem:[#allocation3 + $0x70] sm:$0xff]
  %v642 = vld [vmem:[#allocation3 + $0x78] sm:$0xff]
  %643 = vmax.xlane.f32.xlu0 %v595
  %v644 = vpop.xlane.xlu0 %643
  %645 = vmax.xlane.f32.xlu0 %v596
  %v646 = vpop.xlane.xlu0 %645
  %647 = vmax.xlane.f32.xlu0 %v597
  %v648 = vpop.xlane.xlu0 %647
  %649 = vmax.xlane.f32.xlu0 %v598
  %v650 = vpop.xlane.xlu0 %649
  %651 = vmax.xlane.f32.xlu0 %v599
  %v652 = vpop.xlane.xlu0 %651
  %653 = vmax.xlane.f32.xlu0 %v600
  %v654 = vpop.xlane.xlu0 %653
  %655 = vmax.xlane.f32.xlu0 %v601
  %v656 = vpop.xlane.xlu0 %655
  %657 = vmax.xlane.f32.xlu0 %v602
  %v658 = vpop.xlane.xlu0 %657
  %659 = vmax.xlane.f32.xlu0 %v603
  %v660 = vpop.xlane.xlu0 %659
  %661 = vmax.xlane.f32.xlu0 %v604
  %v662 = vpop.xlane.xlu0 %661
  %663 = vmax.xlane.f32.xlu0 %v605
  %v664 = vpop.xlane.xlu0 %663
  %665 = vmax.xlane.f32.xlu0 %v606
  %v666 = vpop.xlane.xlu0 %665
  %667 = vmax.xlane.f32.xlu0 %v607
  %v668 = vpop.xlane.xlu0 %667
  %669 = vmax.xlane.f32.xlu0 %v608
  %v670 = vpop.xlane.xlu0 %669
  %671 = vmax.xlane.f32.xlu0 %v609
  %v672 = vpop.xlane.xlu0 %671
  %673 = vmax.xlane.f32.xlu0 %v610
  %v674 = vpop.xlane.xlu0 %673
  %v675 = vmax.f32 %v627, %v644
  %v676 = vmax.f32 %v628, %v646
  %v677 = vmax.f32 %v629, %v648
  %v678 = vmax.f32 %v630, %v650
  %v679 = vmax.f32 %v631, %v652
  %v680 = vmax.f32 %v632, %v654
  %v681 = vmax.f32 %v633, %v656
  %v682 = vmax.f32 %v634, %v658
  %v683 = vmax.f32 %v635, %v660
  %v684 = vmax.f32 %v636, %v662
  %v685 = vmax.f32 %v637, %v664
  %v686 = vmax.f32 %v638, %v666
  %v687 = vmax.f32 %v639, %v668
  %v688 = vmax.f32 %v640, %v670
  %v689 = vmax.f32 %v641, %v672
  %v690 = vmax.f32 %v642, %v674
  %v691 = vsub.f32 %v627, %v675
  %v692 = vsub.f32 %v628, %v676
  %v693 = vsub.f32 %v629, %v677
  %v694 = vsub.f32 %v630, %v678
  %v695 = vsub.f32 %v631, %v679
  %v696 = vsub.f32 %v632, %v680
  %v697 = vsub.f32 %v633, %v681
  %v698 = vsub.f32 %v634, %v682
  %v699 = vsub.f32 %v635, %v683
  %v700 = vsub.f32 %v636, %v684
  %v701 = vsub.f32 %v637, %v685
  %v702 = vsub.f32 %v638, %v686
  %v703 = vsub.f32 %v639, %v687
  %v704 = vsub.f32 %v640, %v688
  %v705 = vsub.f32 %v641, %v689
  %v706 = vsub.f32 %v642, %v690
  %v707 = vmul.f32 %v691, 1.442695
  %v708 = vpow.pop %v707
  %v709 = vmul.f32 %v692, 1.442695
  %v710 = vpow.pop %v709
  %v711 = vmul.f32 %v693, 1.442695
  %v712 = vpow.pop %v711
  %v713 = vmul.f32 %v694, 1.442695
  %v714 = vpow.pop %v713
  %v715 = vmul.f32 %v695, 1.442695
  %v716 = vpow.pop %v715
  %v717 = vmul.f32 %v696, 1.442695
  %v718 = vpow.pop %v717
  %v719 = vmul.f32 %v697, 1.442695
  %v720 = vpow.pop %v719
  %v721 = vmul.f32 %v698, 1.442695
  %v722 = vpow.pop %v721
  %v723 = vmul.f32 %v699, 1.442695
  %v724 = vpow.pop %v723
  %v725 = vmul.f32 %v700, 1.442695
  %v726 = vpow.pop %v725
  %v727 = vmul.f32 %v701, 1.442695
  %v728 = vpow.pop %v727
  %v729 = vmul.f32 %v702, 1.442695
  %v730 = vpow.pop %v729
  %v731 = vmul.f32 %v703, 1.442695
  %v732 = vpow.pop %v731
  %v733 = vmul.f32 %v704, 1.442695
  %v734 = vpow.pop %v733
  %v735 = vmul.f32 %v705, 1.442695
  %v736 = vpow.pop %v735
  %v737 = vmul.f32 %v706, 1.442695
  %v738 = vpow.pop %v737
  %v739 = vld [vmem:[#allocation4] sm:$0xff]
  %v740 = vld [vmem:[#allocation4 + $0x8] sm:$0xff]
  %v741 = vld [vmem:[#allocation4 + $0x10] sm:$0xff]
  %v742 = vld [vmem:[#allocation4 + $0x18] sm:$0xff]
  %v743 = vld [vmem:[#allocation4 + $0x20] sm:$0xff]
  %v744 = vld [vmem:[#allocation4 + $0x28] sm:$0xff]
  %v745 = vld [vmem:[#allocation4 + $0x30] sm:$0xff]
  %v746 = vld [vmem:[#allocation4 + $0x38] sm:$0xff]
  %v747 = vld [vmem:[#allocation4 + $0x40] sm:$0xff]
  %v748 = vld [vmem:[#allocation4 + $0x48] sm:$0xff]
  %v749 = vld [vmem:[#allocation4 + $0x50] sm:$0xff]
  %v750 = vld [vmem:[#allocation4 + $0x58] sm:$0xff]
  %v751 = vld [vmem:[#allocation4 + $0x60] sm:$0xff]
  %v752 = vld [vmem:[#allocation4 + $0x68] sm:$0xff]
  %v753 = vld [vmem:[#allocation4 + $0x70] sm:$0xff]
  %v754 = vld [vmem:[#allocation4 + $0x78] sm:$0xff]
  %v755 = vmul.f32 %v708, %v739
  %v756 = vmul.f32 %v710, %v740
  %v757 = vmul.f32 %v712, %v741
  %v758 = vmul.f32 %v714, %v742
  %v759 = vmul.f32 %v716, %v743
  %v760 = vmul.f32 %v718, %v744
  %v761 = vmul.f32 %v720, %v745
  %v762 = vmul.f32 %v722, %v746
  %v763 = vmul.f32 %v724, %v747
  %v764 = vmul.f32 %v726, %v748
  %v765 = vmul.f32 %v728, %v749
  %v766 = vmul.f32 %v730, %v750
  %v767 = vmul.f32 %v732, %v751
  %v768 = vmul.f32 %v734, %v752
  %v769 = vmul.f32 %v736, %v753
  %v770 = vmul.f32 %v738, %v754
  %772 = vset.pattern.permute.xlu0 0
  %773 = vperm.xlu0 %772, %v675
  %v774 = vpop.permute.xlu0 %773
  %777 = vset.pattern.permute.xlu0 0
  %778 = vperm.xlu0 %777, %v676
  %v779 = vpop.permute.xlu0 %778
  %782 = vset.pattern.permute.xlu0 0
  %783 = vperm.xlu0 %782, %v677
  %v784 = vpop.permute.xlu0 %783
  %787 = vset.pattern.permute.xlu0 0
  %788 = vperm.xlu0 %787, %v678
  %v789 = vpop.permute.xlu0 %788
  %792 = vset.pattern.permute.xlu0 0
  %793 = vperm.xlu0 %792, %v679
  %v794 = vpop.permute.xlu0 %793
  %797 = vset.pattern.permute.xlu0 0
  %798 = vperm.xlu0 %797, %v680
  %v799 = vpop.permute.xlu0 %798
  %802 = vset.pattern.permute.xlu0 0
  %803 = vperm.xlu0 %802, %v681
  %v804 = vpop.permute.xlu0 %803
  %807 = vset.pattern.permute.xlu0 0
  %808 = vperm.xlu0 %807, %v682
  %v809 = vpop.permute.xlu0 %808
  %812 = vset.pattern.permute.xlu0 0
  %813 = vperm.xlu0 %812, %v683
  %v814 = vpop.permute.xlu0 %813
  %817 = vset.pattern.permute.xlu0 0
  %818 = vperm.xlu0 %817, %v684
  %v819 = vpop.permute.xlu0 %818
  %822 = vset.pattern.permute.xlu0 0
  %823 = vperm.xlu0 %822, %v685
  %v824 = vpop.permute.xlu0 %823
  %827 = vset.pattern.permute.xlu0 0
  %828 = vperm.xlu0 %827, %v686
  %v829 = vpop.permute.xlu0 %828
  %832 = vset.pattern.permute.xlu0 0
  %833 = vperm.xlu0 %832, %v687
  %v834 = vpop.permute.xlu0 %833
  %837 = vset.pattern.permute.xlu0 0
  %838 = vperm.xlu0 %837, %v688
  %v839 = vpop.permute.xlu0 %838
  %842 = vset.pattern.permute.xlu0 0
  %843 = vperm.xlu0 %842, %v689
  %v844 = vpop.permute.xlu0 %843
  %847 = vset.pattern.permute.xlu0 0
  %848 = vperm.xlu0 %847, %v690
  %v849 = vpop.permute.xlu0 %848
  %v851 = vsub.f32 %v595, %v774
  %v852 = vsub.f32 %v596, %v779
  %v853 = vsub.f32 %v597, %v784
  %v854 = vsub.f32 %v598, %v789
  %v855 = vsub.f32 %v599, %v794
  %v856 = vsub.f32 %v600, %v799
  %v857 = vsub.f32 %v601, %v804
  %v858 = vsub.f32 %v602, %v809
  %v859 = vsub.f32 %v603, %v814
  %v860 = vsub.f32 %v604, %v819
  %v861 = vsub.f32 %v605, %v824
  %v862 = vsub.f32 %v606, %v829
  %v863 = vsub.f32 %v607, %v834
  %v864 = vsub.f32 %v608, %v839
  %v865 = vsub.f32 %v609, %v844
  %v866 = vsub.f32 %v610, %v849
  %v867 = vmul.f32 %v851, 1.442695
  %v868 = vpow.pop %v867
  %v869 = vmul.f32 %v852, 1.442695
  %v870 = vpow.pop %v869
  %v871 = vmul.f32 %v853, 1.442695
  %v872 = vpow.pop %v871
  %v873 = vmul.f32 %v854, 1.442695
  %v874 = vpow.pop %v873
  %v875 = vmul.f32 %v855, 1.442695
  %v876 = vpow.pop %v875
  %v877 = vmul.f32 %v856, 1.442695
  %v878 = vpow.pop %v877
  %v879 = vmul.f32 %v857, 1.442695
  %v880 = vpow.pop %v879
  %v881 = vmul.f32 %v858, 1.442695
  %v882 = vpow.pop %v881
  %v883 = vmul.f32 %v859, 1.442695
  %v884 = vpow.pop %v883
  %v885 = vmul.f32 %v860, 1.442695
  %v886 = vpow.pop %v885
  %v887 = vmul.f32 %v861, 1.442695
  %v888 = vpow.pop %v887
  %v889 = vmul.f32 %v862, 1.442695
  %v890 = vpow.pop %v889
  %v891 = vmul.f32 %v863, 1.442695
  %v892 = vpow.pop %v891
  %v893 = vmul.f32 %v864, 1.442695
  %v894 = vpow.pop %v893
  %v895 = vmul.f32 %v865, 1.442695
  %v896 = vpow.pop %v895
  %v897 = vmul.f32 %v866, 1.442695
  %v898 = vpow.pop %v897
  %899 = vadd.xlane.f32.xlu0 %v868
  %v900 = vpop.xlane.xlu0 %899
  %901 = vadd.xlane.f32.xlu0 %v870
  %v902 = vpop.xlane.xlu0 %901
  %903 = vadd.xlane.f32.xlu0 %v872
  %v904 = vpop.xlane.xlu0 %903
  %905 = vadd.xlane.f32.xlu0 %v874
  %v906 = vpop.xlane.xlu0 %905
  %907 = vadd.xlane.f32.xlu0 %v876
  %v908 = vpop.xlane.xlu0 %907
  %909 = vadd.xlane.f32.xlu0 %v878
  %v910 = vpop.xlane.xlu0 %909
  %911 = vadd.xlane.f32.xlu0 %v880
  %v912 = vpop.xlane.xlu0 %911
  %913 = vadd.xlane.f32.xlu0 %v882
  %v914 = vpop.xlane.xlu0 %913
  %915 = vadd.xlane.f32.xlu0 %v884
  %v916 = vpop.xlane.xlu0 %915
  %917 = vadd.xlane.f32.xlu0 %v886
  %v918 = vpop.xlane.xlu0 %917
  %919 = vadd.xlane.f32.xlu0 %v888
  %v920 = vpop.xlane.xlu0 %919
  %921 = vadd.xlane.f32.xlu0 %v890
  %v922 = vpop.xlane.xlu0 %921
  %923 = vadd.xlane.f32.xlu0 %v892
  %v924 = vpop.xlane.xlu0 %923
  %925 = vadd.xlane.f32.xlu0 %v894
  %v926 = vpop.xlane.xlu0 %925
  %927 = vadd.xlane.f32.xlu0 %v896
  %v928 = vpop.xlane.xlu0 %927
  %929 = vadd.xlane.f32.xlu0 %v898
  %v930 = vpop.xlane.xlu0 %929
  %v931 = vadd.f32 %v755, %v900
  %v932 = vadd.f32 %v756, %v902
  %v933 = vadd.f32 %v757, %v904
  %v934 = vadd.f32 %v758, %v906
  %v935 = vadd.f32 %v759, %v908
  %v936 = vadd.f32 %v760, %v910
  %v937 = vadd.f32 %v761, %v912
  %v938 = vadd.f32 %v762, %v914
  %v939 = vadd.f32 %v763, %v916
  %v940 = vadd.f32 %v764, %v918
  %v941 = vadd.f32 %v765, %v920
  %v942 = vadd.f32 %v766, %v922
  %v943 = vadd.f32 %v767, %v924
  %v944 = vadd.f32 %v768, %v926
  %v945 = vadd.f32 %v769, %v928
  %v946 = vadd.f32 %v770, %v930
  %vm947 = vcmask 7168
  %948 = vst.msk [vmem:[#allocation4] sm:$0xff] %vm947, %v931
  %949 = vst.msk [vmem:[#allocation4 + $0x8] sm:$0xff] %vm947, %v932
  %950 = vst.msk [vmem:[#allocation4 + $0x10] sm:$0xff] %vm947, %v933
  %951 = vst.msk [vmem:[#allocation4 + $0x18] sm:$0xff] %vm947, %v934
  %952 = vst.msk [vmem:[#allocation4 + $0x20] sm:$0xff] %vm947, %v935
  %953 = vst.msk [vmem:[#allocation4 + $0x28] sm:$0xff] %vm947, %v936
  %954 = vst.msk [vmem:[#allocation4 + $0x30] sm:$0xff] %vm947, %v937
  %955 = vst.msk [vmem:[#allocation4 + $0x38] sm:$0xff] %vm947, %v938
  %956 = vst.msk [vmem:[#allocation4 + $0x40] sm:$0xff] %vm947, %v939
  %957 = vst.msk [vmem:[#allocation4 + $0x48] sm:$0xff] %vm947, %v940
  %958 = vst.msk [vmem:[#allocation4 + $0x50] sm:$0xff] %vm947, %v941
  %959 = vst.msk [vmem:[#allocation4 + $0x58] sm:$0xff] %vm947, %v942
  %960 = vst.msk [vmem:[#allocation4 + $0x60] sm:$0xff] %vm947, %v943
  %961 = vst.msk [vmem:[#allocation4 + $0x68] sm:$0xff] %vm947, %v944
  %962 = vst.msk [vmem:[#allocation4 + $0x70] sm:$0xff] %vm947, %v945
  %963 = vst.msk [vmem:[#allocation4 + $0x78] sm:$0xff] %vm947, %v946
  %964 = vst.msk [vmem:[#allocation3] sm:$0xff] %vm947, %v675
  %965 = vst.msk [vmem:[#allocation3 + $0x8] sm:$0xff] %vm947, %v676
  %966 = vst.msk [vmem:[#allocation3 + $0x10] sm:$0xff] %vm947, %v677
  %967 = vst.msk [vmem:[#allocation3 + $0x18] sm:$0xff] %vm947, %v678
  %968 = vst.msk [vmem:[#allocation3 + $0x20] sm:$0xff] %vm947, %v679
  %969 = vst.msk [vmem:[#allocation3 + $0x28] sm:$0xff] %vm947, %v680
  %970 = vst.msk [vmem:[#allocation3 + $0x30] sm:$0xff] %vm947, %v681
  %971 = vst.msk [vmem:[#allocation3 + $0x38] sm:$0xff] %vm947, %v682
  %972 = vst.msk [vmem:[#allocation3 + $0x40] sm:$0xff] %vm947, %v683
  %973 = vst.msk [vmem:[#allocation3 + $0x48] sm:$0xff] %vm947, %v684
  %974 = vst.msk [vmem:[#allocation3 + $0x50] sm:$0xff] %vm947, %v685
  %975 = vst.msk [vmem:[#allocation3 + $0x58] sm:$0xff] %vm947, %v686
  %976 = vst.msk [vmem:[#allocation3 + $0x60] sm:$0xff] %vm947, %v687
  %977 = vst.msk [vmem:[#allocation3 + $0x68] sm:$0xff] %vm947, %v688
  %978 = vst.msk [vmem:[#allocation3 + $0x70] sm:$0xff] %vm947, %v689
  %979 = vst.msk [vmem:[#allocation3 + $0x78] sm:$0xff] %vm947, %v690
  // Predicated region
  $region26: #{ngram_forward_pallas.1} parent=0 // pred_check
    %p980 = pneg %p23
  $region27: #{ngram_forward_pallas.1} parent=0 // pred_check_branch
    %982 = sbr.rel (%p980) target = $region29
  $region28: #{ngram_forward_pallas.1} parent=0 // pred_region
    %v983 = vld [vmem:[#allocation3] sm:$0xff]
    %v984 = vld [vmem:[#allocation3 + $0x8] sm:$0xff]
    %v985 = vld [vmem:[#allocation3 + $0x10] sm:$0xff]
    %v986 = vld [vmem:[#allocation3 + $0x18] sm:$0xff]
    %v987 = vld [vmem:[#allocation3 + $0x20] sm:$0xff]
    %v988 = vld [vmem:[#allocation3 + $0x28] sm:$0xff]
    %v989 = vld [vmem:[#allocation3 + $0x30] sm:$0xff]
    %v990 = vld [vmem:[#allocation3 + $0x38] sm:$0xff]
    %v991 = vld [vmem:[#allocation3 + $0x40] sm:$0xff]
    %v992 = vld [vmem:[#allocation3 + $0x48] sm:$0xff]
    %v993 = vld [vmem:[#allocation3 + $0x50] sm:$0xff]
    %v994 = vld [vmem:[#allocation3 + $0x58] sm:$0xff]
    %v995 = vld [vmem:[#allocation3 + $0x60] sm:$0xff]
    %v996 = vld [vmem:[#allocation3 + $0x68] sm:$0xff]
    %v997 = vld [vmem:[#allocation3 + $0x70] sm:$0xff]
    %v998 = vld [vmem:[#allocation3 + $0x78] sm:$0xff]
    %v999 = vld [vmem:[#allocation4] sm:$0xff]
    %v1000 = vld [vmem:[#allocation4 + $0x8] sm:$0xff]
    %v1001 = vld [vmem:[#allocation4 + $0x10] sm:$0xff]
    %v1002 = vld [vmem:[#allocation4 + $0x18] sm:$0xff]
    %v1003 = vld [vmem:[#allocation4 + $0x20] sm:$0xff]
    %v1004 = vld [vmem:[#allocation4 + $0x28] sm:$0xff]
    %v1005 = vld [vmem:[#allocation4 + $0x30] sm:$0xff]
    %v1006 = vld [vmem:[#allocation4 + $0x38] sm:$0xff]
    %v1007 = vld [vmem:[#allocation4 + $0x40] sm:$0xff]
    %v1008 = vld [vmem:[#allocation4 + $0x48] sm:$0xff]
    %v1009 = vld [vmem:[#allocation4 + $0x50] sm:$0xff]
    %v1010 = vld [vmem:[#allocation4 + $0x58] sm:$0xff]
    %v1011 = vld [vmem:[#allocation4 + $0x60] sm:$0xff]
    %v1012 = vld [vmem:[#allocation4 + $0x68] sm:$0xff]
    %v1013 = vld [vmem:[#allocation4 + $0x70] sm:$0xff]
    %v1014 = vld [vmem:[#allocation4 + $0x78] sm:$0xff]
    %v1015 = vlog2.pop %v999
    %v1016 = vmul.f32 %v1015, 0.6931472
    %v1017 = vlog2.pop %v1000
    %v1018 = vmul.f32 %v1017, 0.6931472
    %v1019 = vlog2.pop %v1001
    %v1020 = vmul.f32 %v1019, 0.6931472
    %v1021 = vlog2.pop %v1002
    %v1022 = vmul.f32 %v1021, 0.6931472
    %v1023 = vlog2.pop %v1003
    %v1024 = vmul.f32 %v1023, 0.6931472
    %v1025 = vlog2.pop %v1004
    %v1026 = vmul.f32 %v1025, 0.6931472
    %v1027 = vlog2.pop %v1005
    %v1028 = vmul.f32 %v1027, 0.6931472
    %v1029 = vlog2.pop %v1006
    %v1030 = vmul.f32 %v1029, 0.6931472
    %v1031 = vlog2.pop %v1007
    %v1032 = vmul.f32 %v1031, 0.6931472
    %v1033 = vlog2.pop %v1008
    %v1034 = vmul.f32 %v1033, 0.6931472
    %v1035 = vlog2.pop %v1009
    %v1036 = vmul.f32 %v1035, 0.6931472
    %v1037 = vlog2.pop %v1010
    %v1038 = vmul.f32 %v1037, 0.6931472
    %v1039 = vlog2.pop %v1011
    %v1040 = vmul.f32 %v1039, 0.6931472
    %v1041 = vlog2.pop %v1012
    %v1042 = vmul.f32 %v1041, 0.6931472
    %v1043 = vlog2.pop %v1013
    %v1044 = vmul.f32 %v1043, 0.6931472
    %v1045 = vlog2.pop %v1014
    %v1046 = vmul.f32 %v1045, 0.6931472
    %v1047 = vadd.f32 %v983, %v1016
    %v1048 = vadd.f32 %v984, %v1018
    %v1049 = vadd.f32 %v985, %v1020
    %v1050 = vadd.f32 %v986, %v1022
    %v1051 = vadd.f32 %v987, %v1024
    %v1052 = vadd.f32 %v988, %v1026
    %v1053 = vadd.f32 %v989, %v1028
    %v1054 = vadd.f32 %v990, %v1030
    %v1055 = vadd.f32 %v991, %v1032
    %v1056 = vadd.f32 %v992, %v1034
    %v1057 = vadd.f32 %v993, %v1036
    %v1058 = vadd.f32 %v994, %v1038
    %v1059 = vadd.f32 %v995, %v1040
    %v1060 = vadd.f32 %v996, %v1042
    %v1061 = vadd.f32 %v997, %v1044
    %v1062 = vadd.f32 %v998, %v1046
    %1063 = vst.msk [vmem:[%s6] sm:$0xff] %vm947, %v1047
    %1064 = vst.msk [vmem:[%s6 + $0x8] sm:$0xff] %vm947, %v1048
    %1065 = vst.msk [vmem:[%s6 + $0x10] sm:$0xff] %vm947, %v1049
    %1066 = vst.msk [vmem:[%s6 + $0x18] sm:$0xff] %vm947, %v1050
    %1067 = vst.msk [vmem:[%s6 + $0x20] sm:$0xff] %vm947, %v1051
    %1068 = vst.msk [vmem:[%s6 + $0x28] sm:$0xff] %vm947, %v1052
    %1069 = vst.msk [vmem:[%s6 + $0x30] sm:$0xff] %vm947, %v1053
    %1070 = vst.msk [vmem:[%s6 + $0x38] sm:$0xff] %vm947, %v1054
    %1071 = vst.msk [vmem:[%s6 + $0x40] sm:$0xff] %vm947, %v1055
    %1072 = vst.msk [vmem:[%s6 + $0x48] sm:$0xff] %vm947, %v1056
    %1073 = vst.msk [vmem:[%s6 + $0x50] sm:$0xff] %vm947, %v1057
    %1074 = vst.msk [vmem:[%s6 + $0x58] sm:$0xff] %vm947, %v1058
    %1075 = vst.msk [vmem:[%s6 + $0x60] sm:$0xff] %vm947, %v1059
    %1076 = vst.msk [vmem:[%s6 + $0x68] sm:$0xff] %vm947, %v1060
    %1077 = vst.msk [vmem:[%s6 + $0x70] sm:$0xff] %vm947, %v1061
    %1078 = vst.msk [vmem:[%s6 + $0x78] sm:$0xff] %vm947, %v1062
  $region29: #{ngram_forward_pallas.1} parent=0 // pred_fallthru
    _
  // Predicated region
  $region30: #{ngram_forward_pallas.1} parent=0 // pred_check
    _
  $region31: #{ngram_forward_pallas.1} parent=0 // pred_check_branch
    %1080 = sbr.rel (0) target = $region33
  $region32: #{ngram_forward_pallas.1} parent=0 // pred_region
    _
  $region33: #{ngram_forward_pallas.1} parent=0 // pred_fallthru
    _
  // Predicated region
  $region34: #{ngram_forward_pallas.1} parent=0 // pred_check
    _
  $region35: #{ngram_forward_pallas.1} parent=0 // pred_check_branch
    %1082 = sbr.rel (0) target = $region37
  $region36: #{ngram_forward_pallas.1} parent=0 // pred_region
    _
  $region37: #{ngram_forward_pallas.1} parent=0 // pred_fallthru
    _
  // Predicated region
  $region38: #{ngram_forward_pallas.1} parent=0 // pred_check
    _
  $region39: #{ngram_forward_pallas.1} parent=0 // pred_check_branch
    %1084 = sbr.rel (0) target = $region41
  $region40: #{ngram_forward_pallas.1} parent=0 // pred_region
    _
  $region41: #{ngram_forward_pallas.1} parent=0 // pred_fallthru
    _
  // Predicated region
  $region42: #{ngram_forward_pallas.1} parent=0 // pred_check
    _
  $region43: #{ngram_forward_pallas.1} parent=0 // pred_check_branch
    %1086 = sbr.rel (0) target = $region45
  $region44: #{ngram_forward_pallas.1} parent=0 // pred_region
    _
  $region45: #{ngram_forward_pallas.1} parent=0 // pred_fallthru
    _

</llo_original>
